<compile_context>
chip_gen: v5e
topology: v5e:2x2
jax: 0.10.0
libtpu: 0.0.40
codegen_flags: <defaults>
</compile_context>

<pallas_src>
import functools

import jax
import jax.numpy as jnp
from jax import lax
from jax.experimental import pallas as pl
from jax.experimental.pallas import tpu as pltpu


_SQRT_2_OVER_PI = 0.7978845608028654  # sqrt(2/pi)
_LN_EPS = 1e-5


def _cdiv(a, b):
    return -(-a // b)


def _round_up(x, m):
    return _cdiv(x, m) * m


def _pick_elem_dtype():
    """bf16 VPU/EUP exists on v6e (Trillium) and later; keep f32 on v5e/older."""
    try:
        kind = jax.devices()[0].device_kind.lower()
    except Exception:
        return "float32"
    if any(tag in kind for tag in ("v6", "v7", "7x", "trillium", "ironwood")):
        return "bfloat16"
    return "float32"


def _gelu_tanh(x):
    # PyTorch nn.GELU(approximate='tanh'); runs in x.dtype (bf16 on v6e/v7x).
    x2 = x * x
    inner = _SQRT_2_OVER_PI * x * (1.0 + 0.044715 * x2)
    return 0.5 * x * (1.0 + jnp.tanh(inner))


def _layer_norm(x, gamma, beta):
    # PyTorch LayerNorm(hidden_dim): biased variance, eps=1e-5.
    # One-pass stats: both reductions act on raw x (back-to-back on the XLU),
    # var = E[x^2] - mean^2 clamped at 0 to guard against cancellation.
    mean = jnp.mean(x, axis=-1, keepdims=True)
    mean_sq = jnp.mean(x * x, axis=-1, keepdims=True)
    var = jnp.maximum(mean_sq - mean * mean, 0.0)
    inv = lax.rsqrt(var + _LN_EPS)
    return (x - mean) * inv * gamma + beta


def mlp_kernel(x_ref, w1_ref, w2_ref, w3t_ref, vec_ref, b3t_ref, o_ref, *, elem_dtype):
    ed = jnp.dtype(elem_dtype)
    x = x_ref[...]                       # (blk, in_dim) bf16 (cast once in wrapper)
    vec = vec_ref[...]                   # (8, hidden)   f32, fused vectors
    b1, g1, be1 = vec[0:1], vec[1:2], vec[2:3]
    b2, g2, be2 = vec[3:4], vec[4:5], vec[5:6]

    # Layer 1: Linear -> LayerNorm (f32 stats) -> GELU(tanh) (elem_dtype)
    h = jnp.dot(x, w1_ref[...], preferred_element_type=jnp.float32) + b1
    h = _gelu_tanh(_layer_norm(h, g1, be1).astype(ed))

    # Layer 2: Linear -> LayerNorm -> GELU(tanh)
    h = jnp.dot(h.astype(jnp.bfloat16), w2_ref[...],
                preferred_element_type=jnp.float32) + b2
    h = _gelu_tanh(_layer_norm(h, g2, be2).astype(ed))

    # Output layer, transposed: (out_rows, hidden) x (blk, hidden)^T -> (out_rows, blk)
    # so the batch sits on the lane axis of the store (lane-dense, tiny writeback).
    out_t = lax.dot_general(
        w3t_ref[...], h.astype(jnp.bfloat16),
        dimension_numbers=(((1,), (1,)), ((), ())),
        preferred_element_type=jnp.float32) + b3t_ref[...]
    o_ref[...] = out_t.astype(o_ref.dtype)


def _choose_tiling(B, block_b):
    """Pick (blk, padded_B). Single grid step for small batches; otherwise
    balance the batch across steps with blk a multiple of 128 (output lane axis)."""
    B8 = _round_up(B, 8)
    if B8 <= block_b:
        return B8, B8
    n = _cdiv(B8, block_b)
    blk = _round_up(_cdiv(B8, n), 128)
    n = _cdiv(B8, blk)
    return blk, blk * n


@functools.partial(jax.jit, static_argnames=("out_dim", "block_b", "elem_dtype"))
def mlp_forward(x, params, out_dim, block_b=512, elem_dtype="float32"):
    """Run the fused MLP. x: (B, in_dim) float32. Returns (B, out_dim) float32."""
    w1, w2, w3t, vec, b3t = params
    B, in_dim = x.shape
    hidden = w1.shape[1]
    out_rows = w3t.shape[0]

    blk, Bp = _choose_tiling(B, block_b)
    xb = x.astype(jnp.bfloat16)          # matmul inputs are bf16 anyway; halves DMA
    if Bp != B:
        xb = jnp.pad(xb, ((0, Bp - B), (0, 0)))

    grid = (Bp // blk,)

    # NOTE(perf review / v7x): if hidden_dim is scaled up, add
    # pipeline_mode=pl.Buffered(1) to the three resident weight specs and set
    # vmem_limit_bytes; negligible at hidden=256 so left at defaults.
    in_specs = [
        pl.BlockSpec((blk, in_dim), lambda i: (i, 0)),       # x (streamed, bf16)
        pl.BlockSpec((in_dim, hidden), lambda i: (0, 0)),    # w1 (resident, bf16)
        pl.BlockSpec((hidden, hidden), lambda i: (0, 0)),    # w2 (resident, bf16)
        pl.BlockSpec((out_rows, hidden), lambda i: (0, 0)),  # w3^T (resident, bf16)
        pl.BlockSpec((8, hidden), lambda i: (0, 0)),         # fused b/gamma/beta
        pl.BlockSpec((out_rows, 1), lambda i: (0, 0)),       # b3^T
    ]
    out_specs = pl.BlockSpec((out_rows, blk), lambda i: (0, i))

    out_t = pl.pallas_call(
        functools.partial(mlp_kernel, elem_dtype=elem_dtype),
        out_shape=jax.ShapeDtypeStruct((out_rows, Bp), jnp.float32),
        grid_spec=pltpu.PrefetchScalarGridSpec(
            num_scalar_prefetch=0,
            grid=grid,
            in_specs=in_specs,
            out_specs=out_specs,
        ),
        compiler_params=pltpu.CompilerParams(
            dimension_semantics=("parallel",),
        ),
    )(xb, w1, w2, w3t, vec, b3t)

    return out_t[:out_dim, :B].T


def init_params(key, in_dim, hidden_dim, out_dim):
    """Deterministic synthetic params (PyTorch-like uniform fan-in init),
    packed into the kernel's layout."""
    ks = jax.random.split(key, 6)

    def linear_init(kw, kb, fan_in, fan_out):
        bound = 1.0 / (fan_in ** 0.5)
        w = jax.random.uniform(kw, (fan_in, fan_out), jnp.float32, -bound, bound)
        b = jax.random.uniform(kb, (fan_out,), jnp.float32, -bound, bound)
        return w, b

    w1, b1 = linear_init(ks[0], ks[1], in_dim, hidden_dim)
    w2, b2 = linear_init(ks[2], ks[3], hidden_dim, hidden_dim)
    w3, b3 = linear_init(ks[4], ks[5], hidden_dim, out_dim)

    # Fuse the six (hidden,) vectors into one (8, hidden) block (rows 6-7 pad).
    vec = jnp.zeros((8, hidden_dim), jnp.float32)
    vec = vec.at[0].set(b1).at[1].set(jnp.ones(hidden_dim)).at[2].set(jnp.zeros(hidden_dim))
    vec = vec.at[3].set(b2).at[4].set(jnp.ones(hidden_dim)).at[5].set(jnp.zeros(hidden_dim))

    # Transposed output projection, rows padded to a multiple of 8.
    out_rows = _round_up(out_dim, 8)
    w3t = jnp.zeros((out_rows, hidden_dim), jnp.float32).at[:out_dim].set(w3.T)
    b3t = jnp.zeros((out_rows, 1), jnp.float32).at[:out_dim, 0].set(b3)

    return (w1.astype(jnp.bfloat16),
            w2.astype(jnp.bfloat16),
            w3t.astype(jnp.bfloat16),
            vec,
            b3t)


def mlp_reference(x, params, out_dim, elem_dtype="float32"):
    """Pure-JAX reference with the same dtype policy as the kernel.
    # TODO(synk): matmul inputs are bf16-quantized; a true f32 PyTorch Mlp
    # will only agree to ~1e-3 relative at hidden=256."""
    w1, w2, w3t, vec, b3t = params
    ed = jnp.dtype(elem_dtype)
    b1, g1, be1 = vec[0:1], vec[1:2], vec[2:3]
    b2, g2, be2 = vec[3:4], vec[4:5], vec[5:6]

    xb = x.astype(jnp.bfloat16)
    h = jnp.dot(xb, w1, preferred_element_type=jnp.float32) + b1
    h = _gelu_tanh(_layer_norm(h, g1, be1).astype(ed))
    h = jnp.dot(h.astype(jnp.bfloat16), w2, preferred_element_type=jnp.float32) + b2
    h = _gelu_tanh(_layer_norm(h, g2, be2).astype(ed))
    out_t = lax.dot_general(
        w3t, h.astype(jnp.bfloat16),
        dimension_numbers=(((1,), (1,)), ((), ())),
        preferred_element_type=jnp.float32) + b3t
    return out_t[:out_dim, :].T


if __name__ == "__main__":
    key = jax.random.PRNGKey(0)
    k_x1, k_x2, k_p = jax.random.split(key, 3)

    in_dim, hidden_dim, out_dim = 16, 256, 1
    elem_dtype = _pick_elem_dtype()
    params = init_params(k_p, in_dim, hidden_dim, out_dim)

    # Case 1: small batch -> single grid step (no forced split on 1-TC chips).
    x1 = jax.random.normal(k_x1, (24, in_dim), jnp.float32)
    out1 = mlp_forward(x1, params, out_dim, elem_dtype=elem_dtype)
    jax.block_until_ready(out1)
    ref1 = mlp_reference(x1, params, out_dim, elem_dtype=elem_dtype)
    assert out1.shape == (24, out_dim)
    assert jnp.allclose(out1, ref1, atol=1e-2, rtol=1e-2), "case1 mismatch vs reference"

    # Case 2: multi-step grid with batch padding (exercises blk%128 output tiling).
    x2 = jax.random.normal(k_x2, (300, in_dim), jnp.float32)
    out2 = mlp_forward(x2, params, out_dim, block_b=128, elem_dtype=elem_dtype)
    jax.block_until_ready(out2)
    ref2 = mlp_reference(x2, params, out_dim, elem_dtype=elem_dtype)
    assert out2.shape == (300, out_dim)
    assert jnp.allclose(out2, ref2, atol=1e-2, rtol=1e-2), "case2 mismatch vs reference"

    print("KERNEL_OK")
</pallas_src>

<mosaic_0001>
module attributes {stable_mosaic.version = 11 : i64} {
  func.func @mlp_kernel(%arg0: i32, %arg1: memref<24x16xbf16, #tpu.memory_space<vmem>>, %arg2: memref<16x256xbf16, #tpu.memory_space<vmem>>, %arg3: memref<256x256xbf16, #tpu.memory_space<vmem>>, %arg4: memref<8x256xbf16, #tpu.memory_space<vmem>>, %arg5: memref<8x256xf32, #tpu.memory_space<vmem>>, %arg6: memref<8x1xf32, #tpu.memory_space<vmem>>, %arg7: memref<8x24xf32, #tpu.memory_space<vmem>>) attributes {dimension_semantics = [#tpu.dimension_semantics<parallel>], iteration_bounds = array<i64: 1>, scalar_prefetch = 0 : i64, scratch_operands = 0 : i64, tpu.core_type = #tpu.core_type<tc>, window_params = [{transform_indices = @transform_0, window_bounds = array<i64: 24, 16>}, {pipeline_mode = #tpu.pipeline_mode<synchronous>, transform_indices = @transform_1, window_bounds = array<i64: 16, 256>}, {pipeline_mode = #tpu.pipeline_mode<synchronous>, transform_indices = @transform_2, window_bounds = array<i64: 256, 256>}, {pipeline_mode = #tpu.pipeline_mode<synchronous>, transform_indices = @transform_3, window_bounds = array<i64: 8, 256>}, {pipeline_mode = #tpu.pipeline_mode<synchronous>, transform_indices = @transform_4, window_bounds = array<i64: 8, 256>}, {pipeline_mode = #tpu.pipeline_mode<synchronous>, transform_indices = @transform_5, window_bounds = array<i64: 8, 1>}, {transform_indices = @transform_6, window_bounds = array<i64: 8, 24>}]} {
    %c0 = arith.constant 0 : index
    %c0_0 = arith.constant 0 : index
    %0 = vector.load %arg1[%c0, %c0_0] : memref<24x16xbf16, #tpu.memory_space<vmem>>, vector<24x16xbf16>
    %c0_1 = arith.constant 0 : index
    %c0_2 = arith.constant 0 : index
    %1 = vector.load %arg5[%c0_1, %c0_2] : memref<8x256xf32, #tpu.memory_space<vmem>>, vector<8x256xf32>
    %2 = vector.extract_strided_slice %1 {offsets = [0, 0], sizes = [1, 256], strides = [1, 1]} : vector<8x256xf32> to vector<1x256xf32>
    %3 = vector.extract_strided_slice %1 {offsets = [1, 0], sizes = [1, 256], strides = [1, 1]} : vector<8x256xf32> to vector<1x256xf32>
    %4 = vector.extract_strided_slice %1 {offsets = [2, 0], sizes = [1, 256], strides = [1, 1]} : vector<8x256xf32> to vector<1x256xf32>
    %5 = vector.extract_strided_slice %1 {offsets = [3, 0], sizes = [1, 256], strides = [1, 1]} : vector<8x256xf32> to vector<1x256xf32>
    %6 = vector.extract_strided_slice %1 {offsets = [4, 0], sizes = [1, 256], strides = [1, 1]} : vector<8x256xf32> to vector<1x256xf32>
    %7 = vector.extract_strided_slice %1 {offsets = [5, 0], sizes = [1, 256], strides = [1, 1]} : vector<8x256xf32> to vector<1x256xf32>
    %c0_3 = arith.constant 0 : index
    %c0_4 = arith.constant 0 : index
    %8 = vector.load %arg2[%c0_3, %c0_4] : memref<16x256xbf16, #tpu.memory_space<vmem>>, vector<16x256xbf16>
    %cst = arith.constant dense<0.000000e+00> : vector<24x256xf32>
    %9 = tpu.matmul %0, %8, %cst {dimension_numbers = #tpu.dot_dimension_numbers<[1], [0], [0], [1], [0, 0, 1, 1], [], []>} : vector<24x16xbf16>, vector<16x256xbf16>, vector<24x256xf32> -> vector<24x256xf32>
    %10 = vector.broadcast %2 : vector<1x256xf32> to vector<24x256xf32>
    %11 = arith.addf %9, %10 : vector<24x256xf32>
    %cst_5 = arith.constant dense<0.000000e+00> : vector<24xf32>
    %12 = vector.multi_reduction <add>, %11, %cst_5 [1] : vector<24x256xf32> to vector<24xf32>
    %13 = vector.shape_cast %12 : vector<24xf32> to vector<24x1xf32>
    %cst_6 = arith.constant 2.560000e+02 : f32
    %14 = vector.broadcast %cst_6 : f32 to vector<24x1xf32>
    %15 = arith.divf %13, %14 : vector<24x1xf32>
    %16 = arith.mulf %11, %11 : vector<24x256xf32>
    %cst_7 = arith.constant dense<0.000000e+00> : vector<24xf32>
    %17 = vector.multi_reduction <add>, %16, %cst_7 [1] : vector<24x256xf32> to vector<24xf32>
    %18 = vector.shape_cast %17 : vector<24xf32> to vector<24x1xf32>
    %cst_8 = arith.constant 2.560000e+02 : f32
    %19 = vector.broadcast %cst_8 : f32 to vector<24x1xf32>
    %20 = arith.divf %18, %19 : vector<24x1xf32>
    %21 = arith.mulf %15, %15 : vector<24x1xf32>
    %22 = arith.subf %20, %21 : vector<24x1xf32>
    %cst_9 = arith.constant 0.000000e+00 : f32
    %23 = vector.broadcast %cst_9 : f32 to vector<24x1xf32>
    %24 = arith.maximumf %22, %23 : vector<24x1xf32>
    %cst_10 = arith.constant 9.99999974E-6 : f32
    %25 = vector.broadcast %cst_10 : f32 to vector<24x1xf32>
    %26 = arith.addf %24, %25 : vector<24x1xf32>
    %27 = math.rsqrt %26 : vector<24x1xf32>
    %28 = vector.broadcast %15 : vector<24x1xf32> to vector<24x256xf32>
    %29 = arith.subf %11, %28 : vector<24x256xf32>
    %30 = vector.broadcast %27 : vector<24x1xf32> to vector<24x256xf32>
    %31 = arith.mulf %29, %30 : vector<24x256xf32>
    %32 = vector.broadcast %3 : vector<1x256xf32> to vector<24x256xf32>
    %33 = arith.mulf %31, %32 : vector<24x256xf32>
    %34 = vector.broadcast %4 : vector<1x256xf32> to vector<24x256xf32>
    %35 = arith.addf %33, %34 : vector<24x256xf32>
    %36 = arith.mulf %35, %35 : vector<24x256xf32>
    %cst_11 = arith.constant 0.797884583 : f32
    %37 = vector.broadcast %cst_11 : f32 to vector<24x256xf32>
    %38 = arith.mulf %37, %35 : vector<24x256xf32>
    %cst_12 = arith.constant 4.471500e-02 : f32
    %39 = vector.broadcast %cst_12 : f32 to vector<24x256xf32>
    %40 = arith.mulf %39, %36 : vector<24x256xf32>
    %cst_13 = arith.constant 1.000000e+00 : f32
    %41 = vector.broadcast %cst_13 : f32 to vector<24x256xf32>
    %42 = arith.addf %41, %40 : vector<24x256xf32>
    %43 = arith.mulf %38, %42 : vector<24x256xf32>
    %cst_14 = arith.constant 5.000000e-01 : f32
    %44 = vector.broadcast %cst_14 : f32 to vector<24x256xf32>
    %45 = arith.mulf %44, %35 : vector<24x256xf32>
    %46 = math.tanh %43 : vector<24x256xf32>
    %cst_15 = arith.constant 1.000000e+00 : f32
    %47 = vector.broadcast %cst_15 : f32 to vector<24x256xf32>
    %48 = arith.addf %47, %46 : vector<24x256xf32>
    %49 = arith.mulf %45, %48 : vector<24x256xf32>
    %50 = arith.truncf %49 : vector<24x256xf32> to vector<24x256xbf16>
    %c0_16 = arith.constant 0 : index
    %c0_17 = arith.constant 0 : index
    %51 = vector.load %arg3[%c0_16, %c0_17] : memref<256x256xbf16, #tpu.memory_space<vmem>>, vector<256x256xbf16>
    %cst_18 = arith.constant dense<0.000000e+00> : vector<24x256xf32>
    %52 = tpu.matmul %50, %51, %cst_18 {dimension_numbers = #tpu.dot_dimension_numbers<[1], [0], [0], [1], [0, 0, 1, 1], [], []>} : vector<24x256xbf16>, vector<256x256xbf16>, vector<24x256xf32> -> vector<24x256xf32>
    %53 = vector.broadcast %5 : vector<1x256xf32> to vector<24x256xf32>
    %54 = arith.addf %52, %53 : vector<24x256xf32>
    %cst_19 = arith.constant dense<0.000000e+00> : vector<24xf32>
    %55 = vector.multi_reduction <add>, %54, %cst_19 [1] : vector<24x256xf32> to vector<24xf32>
    %56 = vector.shape_cast %55 : vector<24xf32> to vector<24x1xf32>
    %cst_20 = arith.constant 2.560000e+02 : f32
    %57 = vector.broadcast %cst_20 : f32 to vector<24x1xf32>
    %58 = arith.divf %56, %57 : vector<24x1xf32>
    %59 = arith.mulf %54, %54 : vector<24x256xf32>
    %cst_21 = arith.constant dense<0.000000e+00> : vector<24xf32>
    %60 = vector.multi_reduction <add>, %59, %cst_21 [1] : vector<24x256xf32> to vector<24xf32>
    %61 = vector.shape_cast %60 : vector<24xf32> to vector<24x1xf32>
    %cst_22 = arith.constant 2.560000e+02 : f32
    %62 = vector.broadcast %cst_22 : f32 to vector<24x1xf32>
    %63 = arith.divf %61, %62 : vector<24x1xf32>
    %64 = arith.mulf %58, %58 : vector<24x1xf32>
    %65 = arith.subf %63, %64 : vector<24x1xf32>
    %cst_23 = arith.constant 0.000000e+00 : f32
    %66 = vector.broadcast %cst_23 : f32 to vector<24x1xf32>
    %67 = arith.maximumf %65, %66 : vector<24x1xf32>
    %cst_24 = arith.constant 9.99999974E-6 : f32
    %68 = vector.broadcast %cst_24 : f32 to vector<24x1xf32>
    %69 = arith.addf %67, %68 : vector<24x1xf32>
    %70 = math.rsqrt %69 : vector<24x1xf32>
    %71 = vector.broadcast %58 : vector<24x1xf32> to vector<24x256xf32>
    %72 = arith.subf %54, %71 : vector<24x256xf32>
    %73 = vector.broadcast %70 : vector<24x1xf32> to vector<24x256xf32>
    %74 = arith.mulf %72, %73 : vector<24x256xf32>
    %75 = vector.broadcast %6 : vector<1x256xf32> to vector<24x256xf32>
    %76 = arith.mulf %74, %75 : vector<24x256xf32>
    %77 = vector.broadcast %7 : vector<1x256xf32> to vector<24x256xf32>
    %78 = arith.addf %76, %77 : vector<24x256xf32>
    %79 = arith.mulf %78, %78 : vector<24x256xf32>
    %cst_25 = arith.constant 0.797884583 : f32
    %80 = vector.broadcast %cst_25 : f32 to vector<24x256xf32>
    %81 = arith.mulf %80, %78 : vector<24x256xf32>
    %cst_26 = arith.constant 4.471500e-02 : f32
    %82 = vector.broadcast %cst_26 : f32 to vector<24x256xf32>
    %83 = arith.mulf %82, %79 : vector<24x256xf32>
    %cst_27 = arith.constant 1.000000e+00 : f32
    %84 = vector.broadcast %cst_27 : f32 to vector<24x256xf32>
    %85 = arith.addf %84, %83 : vector<24x256xf32>
    %86 = arith.mulf %81, %85 : vector<24x256xf32>
    %cst_28 = arith.constant 5.000000e-01 : f32
    %87 = vector.broadcast %cst_28 : f32 to vector<24x256xf32>
    %88 = arith.mulf %87, %78 : vector<24x256xf32>
    %89 = math.tanh %86 : vector<24x256xf32>
    %cst_29 = arith.constant 1.000000e+00 : f32
    %90 = vector.broadcast %cst_29 : f32 to vector<24x256xf32>
    %91 = arith.addf %90, %89 : vector<24x256xf32>
    %92 = arith.mulf %88, %91 : vector<24x256xf32>
    %c0_30 = arith.constant 0 : index
    %c0_31 = arith.constant 0 : index
    %93 = vector.load %arg4[%c0_30, %c0_31] : memref<8x256xbf16, #tpu.memory_space<vmem>>, vector<8x256xbf16>
    %94 = arith.truncf %92 : vector<24x256xf32> to vector<24x256xbf16>
    %cst_32 = arith.constant dense<0.000000e+00> : vector<8x24xf32>
    %95 = tpu.matmul %93, %94, %cst_32 {dimension_numbers = #tpu.dot_dimension_numbers<[1], [1], [0], [0], [0, 0, 1, 0], [], []>} : vector<8x256xbf16>, vector<24x256xbf16>, vector<8x24xf32> -> vector<8x24xf32>
    %c0_33 = arith.constant 0 : index
    %c0_34 = arith.constant 0 : index
    %96 = vector.load %arg6[%c0_33, %c0_34] : memref<8x1xf32, #tpu.memory_space<vmem>>, vector<8x1xf32>
    %97 = vector.broadcast %96 : vector<8x1xf32> to vector<8x24xf32>
    %98 = arith.addf %95, %97 : vector<8x24xf32>
    %c0_35 = arith.constant 0 : index
    %c0_36 = arith.constant 0 : index
    %99 = vector.load %arg7[%c0_35, %c0_36] : memref<8x24xf32, #tpu.memory_space<vmem>>, vector<8x24xf32>
    tpu.vector_store %arg7[%c0_35, %c0_36], %98 {strides = array<i32>} : memref<8x24xf32, #tpu.memory_space<vmem>>, vector<8x24xf32>,
    return
  }
  func.func @transform_0(%arg0: i32) -> (i32, i32) {
    %c0_i32 = arith.constant 0 : i32
    %c0_i32_0 = arith.constant 0 : i32
    return %arg0, %c0_i32 : i32, i32
  }
  func.func @transform_1(%arg0: i32) -> (i32, i32) {
    %c0_i32 = arith.constant 0 : i32
    %c0_i32_0 = arith.constant 0 : i32
    %c0_i32_1 = arith.constant 0 : i32
    return %c0_i32, %c0_i32_0 : i32, i32
  }
  func.func @transform_2(%arg0: i32) -> (i32, i32) {
    %c0_i32 = arith.constant 0 : i32
    %c0_i32_0 = arith.constant 0 : i32
    %c0_i32_1 = arith.constant 0 : i32
    return %c0_i32, %c0_i32_0 : i32, i32
  }
  func.func @transform_3(%arg0: i32) -> (i32, i32) {
    %c0_i32 = arith.constant 0 : i32
    %c0_i32_0 = arith.constant 0 : i32
    %c0_i32_1 = arith.constant 0 : i32
    return %c0_i32, %c0_i32_0 : i32, i32
  }
  func.func @transform_4(%arg0: i32) -> (i32, i32) {
    %c0_i32 = arith.constant 0 : i32
    %c0_i32_0 = arith.constant 0 : i32
    %c0_i32_1 = arith.constant 0 : i32
    return %c0_i32, %c0_i32_0 : i32, i32
  }
  func.func @transform_5(%arg0: i32) -> (i32, i32) {
    %c0_i32 = arith.constant 0 : i32
    %c0_i32_0 = arith.constant 0 : i32
    %c0_i32_1 = arith.constant 0 : i32
    return %c0_i32, %c0_i32_0 : i32, i32
  }
  func.func @transform_6(%arg0: i32) -> (i32, i32) {
    %c0_i32 = arith.constant 0 : i32
    %c0_i32_0 = arith.constant 0 : i32
    return %c0_i32, %arg0 : i32, i32
  }
}

</mosaic_0001>

<llo_original>
// kernel: mlp_forward.1
$region0: #{mlp_forward.1}
  #allocation0 [shape = 'u32[]', space=smem, size = 0x4, offset = 0x4, fixed_abs, tag = 'smem constant byte address 0x4 - core index']
  #allocation1 [shape = 'u32[72,128]{1,0:T(1,128)}', space=vmem, size = 0x9000, scoped, tag = 'internal scratch']
  %s0 = inlined_call_operand.vmem [shape: bf16[24,16], index: 0, kind: input, shape index: {}]
  %s1 = inlined_call_operand.vmem [shape: bf16[16,256], index: 1, kind: input, shape index: {}]
  %s2 = inlined_call_operand.hbm [shape: bf16[256,256], index: 2, kind: input, shape index: {}]
  %s3 = inlined_call_operand.vmem [shape: bf16[8,256], index: 3, kind: input, shape index: {}]
  %s4 = inlined_call_operand.vmem [shape: f32[8,256], index: 4, kind: input, shape index: {}]
  %s5 = inlined_call_operand.vmem [shape: f32[8,1], index: 5, kind: input, shape index: {}]
  %s6 = inlined_call_operand.vmem [shape: f32[8,24], index: 6, kind: output, shape index: {}]
  %s7 = sld [smem:[#allocation0]]
  $region38: #{mlp_forward.1} parent=0
    _
  %s9 = ssub.s32 1, %s7
  %s10 = scalar_select 0, %s9, %s7
  $region1: #{mlp_forward.1} parent=0
    #allocation2 [shape = 'u8[131072]{0}', space=vmem, size = 0x20000, scoped, tag = 'input window, operand 2, single buffered']
    #allocation3 [shape = 's32[1]{0}', space=sflag, size = 0x4, scoped, tag = 'scoped memory for mlp_forward.1']
    %11 = vsyncpa [#allocation3], 0
    // Predicated region
    $region2: #{mlp_forward.1} parent=1 // pred_check
      _
    $region3: #{mlp_forward.1} parent=1 // pred_check_branch
      %13 = sbr.rel (0) target = $region5
    $region4: #{mlp_forward.1} parent=1 // pred_region
      _
    $region5: #{mlp_forward.1} parent=1 // pred_fallthru
      _
    // Predicated region
    $region6: #{mlp_forward.1} parent=1 // pred_check
      _
    $region7: #{mlp_forward.1} parent=1 // pred_check_branch
      %15 = sbr.rel (0) target = $region9
    $region8: #{mlp_forward.1} parent=1 // pred_region
      _
    $region9: #{mlp_forward.1} parent=1 // pred_fallthru
      _
    // Predicated region
    $region10: #{mlp_forward.1} parent=1 // pred_check
      _
    $region11: #{mlp_forward.1} parent=1 // pred_check_branch
      %17 = sbr.rel (0) target = $region13
    $region12: #{mlp_forward.1} parent=1 // pred_region
      %19 = vsyncadd [#allocation3], 0
      %s20 = sshll.u32 %s2, 4
      %s21 = int_to_ptr.hbm [resolvable:$true] %s20
      %s22 = sshll.u32 [#allocation2], 4
      %s23 = int_to_ptr.vmem [resolvable:$true] %s22
      %28 = dma.hbm_to_vmem [thread:$0]  %s21, 4096, %s23, [#allocation3], 128, 128, 8
    $region13: #{mlp_forward.1} parent=1 // pred_fallthru
      _
    // Predicated region
    $region14: #{mlp_forward.1} parent=1 // pred_check
      _
    $region15: #{mlp_forward.1} parent=1 // pred_check_branch
      %30 = sbr.rel (0) target = $region17
    $region16: #{mlp_forward.1} parent=1 // pred_region
      _
    $region17: #{mlp_forward.1} parent=1 // pred_fallthru
      _
    // Predicated region
    $region18: #{mlp_forward.1} parent=1 // pred_check
      _
    $region19: #{mlp_forward.1} parent=1 // pred_check_branch
      %32 = sbr.rel (0) target = $region21
    $region20: #{mlp_forward.1} parent=1 // pred_region
      _
    $region21: #{mlp_forward.1} parent=1 // pred_fallthru
      _
    // Predicated region
    $region22: #{mlp_forward.1} parent=1 // pred_check
      _
    $region23: #{mlp_forward.1} parent=1 // pred_check_branch
      %34 = sbr.rel (0) target = $region25
    $region24: #{mlp_forward.1} parent=1 // pred_region
      _
    $region25: #{mlp_forward.1} parent=1 // pred_fallthru
      _
    // Predicated region
    $region26: #{mlp_forward.1} parent=1 // pred_check
      _
    $region27: #{mlp_forward.1} parent=1 // pred_check_branch
      %36 = sbr.rel (0) target = $region29
    $region28: #{mlp_forward.1} parent=1 // pred_region
      %38 = dma.done [#allocation3], 4096
    $region29: #{mlp_forward.1} parent=1 // pred_fallthru
      _
    %v40 = vld [vmem:[%s0] sm:$0xf]
    %v41 = vld [vmem:[%s0 + $0x4] sm:$0xf]
    %v42 = vld [vmem:[%s0 + $0x8] sm:$0xf]
    %v43 = vld [vmem:[%s4] sm:$0xff]
    %v44 = vld [vmem:[%s4 + $0x8] sm:$0xff]
    %v45 = vld [vmem:[%s1] sm:$0xff]
    %v46 = vld [vmem:[%s1 + $0x8] sm:$0xff]
    %v47 = vperm.slane %v43, 0
    %v48 = vperm.slane %v44, 0
    %v52 = vunpack.c.l.b16 %v40
    %v53 = vunpack.c.l.b16 %v41
    %v54 = vunpack.c.l.b16 %v42
    %v55 = vpack.c.b16 %v53, %v52
    %v56 = vpack.c.b16 %v54, %v54
    %v59 = vunpack.c.l.b16 %v45
    %v60 = vunpack.c.h.b16 %v45
    %v61 = vunpack.c.l.b16 %v46
    %v62 = vunpack.c.h.b16 %v46
    %v63 = vpack.c.b16 %v61, %v59
    %v64 = vpack.c.b16 %v62, %v60
    %vm67 = vcmask 130048
    %v69 = vsel %vm67, %v55, 0
    %v72 = vsel %vm67, %v56, 0
    %74 = vmatpush.bf16.msra.mxu0 0
    %75 = vmatpush.bf16.msra.mxu0 0
    %76 = vmatpush.bf16.msra.mxu0 0
    %77 = vmatpush.bf16.msra.mxu0 0
    %78 = vmatpush.bf16.msra.mxu0 0
    %79 = vmatpush.bf16.msra.mxu0 0
    %80 = vmatpush.bf16.msra.mxu0 0
    %81 = vmatpush.bf16.msra.mxu0 %v63
    %82 = vmatmul.bf16.gmra.mxu0 %v69
    %v83 = vpop.f32.mrf.mxu0
    %v84 = vadd.f32 %v47, %v83
    %v85 = vpop.f32.mrf.mxu0
    %v86 = vadd.f32 %v47, %v85
    %87 = vmatmul.bf16.gmra.mxu0 %v72
    %v88 = vpop.f32.mrf.mxu0
    %v89 = vadd.f32 %v47, %v88
    %v90 = vpop.f32.mrf.mxu0
    %91 = vdwg.mxu0
    %92 = vmatpush.bf16.msra.mxu0 0
    %93 = vmatpush.bf16.msra.mxu0 0
    %94 = vmatpush.bf16.msra.mxu0 0
    %95 = vmatpush.bf16.msra.mxu0 0
    %96 = vmatpush.bf16.msra.mxu0 0
    %97 = vmatpush.bf16.msra.mxu0 0
    %98 = vmatpush.bf16.msra.mxu0 0
    %99 = vmatpush.bf16.msra.mxu0 %v64
    %100 = vmatmul.bf16.gmra.mxu0 %v69
    %v101 = vpop.f32.mrf.mxu0
    %v102 = vadd.f32 %v48, %v101
    %v103 = vpop.f32.mrf.mxu0
    %v104 = vadd.f32 %v48, %v103
    %105 = vmatmul.bf16.gmra.mxu0 %v72
    %v106 = vpop.f32.mrf.mxu0
    %v107 = vadd.f32 %v48, %v106
    %v108 = vpop.f32.mrf.mxu0
    %109 = vdwg.mxu0
    %v110 = vadd.f32 %v84, %v102
    %111 = vadd.xlane.f32.xlu0 %v110
    %v112 = vpop.xlane.xlu0 %111
    %v113 = vadd.f32 %v86, %v104
    %114 = vadd.xlane.f32.xlu0 %v113
    %v115 = vpop.xlane.xlu0 %114
    %v116 = vadd.f32 %v89, %v107
    %117 = vadd.xlane.f32.xlu0 %v116
    %v118 = vpop.xlane.xlu0 %117
    %v119 = vrcp.pop 256.0
    %v120 = vmul.f32 256.0, %v119
    %v121 = vsub.f32 1.0, %v120
    %v122 = vmul.f32 %v119, %v121
    %v123 = vadd.f32 %v119, %v122
    %vm124 = vweird.f32 %v119
    %v125 = vsel %vm124, %v119, %v123
    %v126 = vmul.f32 %v112, %v125
    %v127 = vmul.f32 %v115, %v125
    %v128 = vmul.f32 %v118, %v125
    %v129 = vmul.f32 %v84, %v84
    %v130 = vmul.f32 %v102, %v102
    %v131 = vmul.f32 %v86, %v86
    %v132 = vmul.f32 %v104, %v104
    %v133 = vmul.f32 %v89, %v89
    %v134 = vmul.f32 %v107, %v107
    %v135 = vadd.f32 %v129, %v130
    %136 = vadd.xlane.f32.xlu0 %v135
    %v137 = vpop.xlane.xlu0 %136
    %v138 = vadd.f32 %v131, %v132
    %139 = vadd.xlane.f32.xlu0 %v138
    %v140 = vpop.xlane.xlu0 %139
    %v141 = vadd.f32 %v133, %v134
    %142 = vadd.xlane.f32.xlu0 %v141
    %v143 = vpop.xlane.xlu0 %142
    %v144 = vmul.f32 %v137, %v125
    %v145 = vmul.f32 %v140, %v125
    %v146 = vmul.f32 %v143, %v125
    %v147 = vmul.f32 %v126, %v126
    %v148 = vmul.f32 %v127, %v127
    %v149 = vmul.f32 %v128, %v128
    %v150 = vsub.f32 %v144, %v147
    %v151 = vsub.f32 %v145, %v148
    %v152 = vsub.f32 %v146, %v149
    %v153 = vmax.f32 %v150, 0.0
    %v154 = vmax.f32 %v151, 0.0
    %v155 = vmax.f32 %v152, 0.0
    %v156 = vadd.f32 %v153, 1e-05
    %v157 = vadd.f32 %v154, 1e-05
    %v158 = vadd.f32 %v155, 1e-05
    %v159 = vrsqrt.pop %v156
    %v160 = vmul.f32 %v159, %v156
    %v161 = vmul.f32 %v160, %v159
    %v162 = vmul.f32 0.5, %v161
    %v163 = vsub.f32 1.5, %v162
    %v164 = vmul.f32 %v159, %v163
    %vm165 = vweird.f32 %v156
    %vm166 = vweird.f32 %v159
    %vm167 = vmor %vm165, %vm166
    %v168 = vsel %vm167, %v159, %v164
    %v169 = vrsqrt.pop %v157
    %v170 = vmul.f32 %v169, %v157
    %v171 = vmul.f32 %v170, %v169
    %v172 = vmul.f32 0.5, %v171
    %v173 = vsub.f32 1.5, %v172
    %v174 = vmul.f32 %v169, %v173
    %vm175 = vweird.f32 %v157
    %vm176 = vweird.f32 %v169
    %vm177 = vmor %vm175, %vm176
    %v178 = vsel %vm177, %v169, %v174
    %v179 = vrsqrt.pop %v158
    %v180 = vmul.f32 %v179, %v158
    %v181 = vmul.f32 %v180, %v179
    %v182 = vmul.f32 0.5, %v181
    %v183 = vsub.f32 1.5, %v182
    %v184 = vmul.f32 %v179, %v183
    %vm185 = vweird.f32 %v158
    %vm186 = vweird.f32 %v179
    %vm187 = vmor %vm185, %vm186
    %v188 = vsel %vm187, %v179, %v184
    %v189 = vsub.f32 %v84, %v126
    %v190 = vsub.f32 %v102, %v126
    %v191 = vsub.f32 %v86, %v127
    %v192 = vsub.f32 %v104, %v127
    %v193 = vsub.f32 %v89, %v128
    %v194 = vsub.f32 %v107, %v128
    %v195 = vmul.f32 %v189, %v168
    %v196 = vmul.f32 %v190, %v168
    %v197 = vmul.f32 %v191, %v178
    %v198 = vmul.f32 %v192, %v178
    %v199 = vmul.f32 %v193, %v188
    %v200 = vmul.f32 %v194, %v188
    %v201 = vperm.slane %v43, 1
    %v202 = vperm.slane %v44, 1
    %v203 = vmul.f32 %v195, %v201
    %v204 = vmul.f32 %v196, %v202
    %v205 = vmul.f32 %v197, %v201
    %v206 = vmul.f32 %v198, %v202
    %v207 = vmul.f32 %v199, %v201
    %v208 = vmul.f32 %v200, %v202
    %v209 = vperm.slane %v43, 2
    %v210 = vperm.slane %v44, 2
    %v211 = vadd.f32 %v203, %v209
    %v212 = vadd.f32 %v204, %v210
    %v213 = vadd.f32 %v205, %v209
    %v214 = vadd.f32 %v206, %v210
    %v215 = vadd.f32 %v207, %v209
    %v216 = vadd.f32 %v208, %v210
    %v217 = vmul.f32 %v211, %v211
    %v218 = vmul.f32 %v212, %v212
    %v219 = vmul.f32 %v213, %v213
    %v220 = vmul.f32 %v214, %v214
    %v221 = vmul.f32 %v215, %v215
    %v222 = vmul.f32 %v216, %v216
    %v223 = vmul.f32 %v211, 0.7978846
    %v224 = vmul.f32 %v212, 0.7978846
    %v225 = vmul.f32 %v213, 0.7978846
    %v226 = vmul.f32 %v214, 0.7978846
    %v227 = vmul.f32 %v215, 0.7978846
    %v228 = vmul.f32 %v216, 0.7978846
    %v229 = vmul.f32 %v217, 0.044715
    %v230 = vmul.f32 %v218, 0.044715
    %v231 = vmul.f32 %v219, 0.044715
    %v232 = vmul.f32 %v220, 0.044715
    %v233 = vmul.f32 %v221, 0.044715
    %v234 = vmul.f32 %v222, 0.044715
    %v235 = vadd.f32 %v229, 1.0
    %v236 = vadd.f32 %v230, 1.0
    %v237 = vadd.f32 %v231, 1.0
    %v238 = vadd.f32 %v232, 1.0
    %v239 = vadd.f32 %v233, 1.0
    %v240 = vadd.f32 %v234, 1.0
    %v241 = vmul.f32 %v223, %v235
    %v242 = vmul.f32 %v224, %v236
    %v243 = vmul.f32 %v225, %v237
    %v244 = vmul.f32 %v226, %v238
    %v245 = vmul.f32 %v227, %v239
    %v246 = vmul.f32 %v228, %v240
    %v247 = vmul.f32 %v211, 0.5
    %v248 = vmul.f32 %v212, 0.5
    %v249 = vmul.f32 %v213, 0.5
    %v250 = vmul.f32 %v214, 0.5
    %v251 = vmul.f32 %v215, 0.5
    %v252 = vmul.f32 %v216, 0.5
    %v253 = vtanh.pop %v241
    %v254 = vtanh.pop %v242
    %v255 = vtanh.pop %v243
    %v256 = vtanh.pop %v244
    %v257 = vtanh.pop %v245
    %v258 = vtanh.pop %v246
    %v259 = vadd.f32 %v253, 1.0
    %v260 = vadd.f32 %v254, 1.0
    %v261 = vadd.f32 %v255, 1.0
    %v262 = vadd.f32 %v256, 1.0
    %v263 = vadd.f32 %v257, 1.0
    %v264 = vadd.f32 %v258, 1.0
    %v265 = vmul.f32 %v247, %v259
    %v266 = vmul.f32 %v248, %v260
    %v267 = vmul.f32 %v249, %v261
    %v268 = vmul.f32 %v250, %v262
    %v269 = vmul.f32 %v251, %v263
    %v270 = vmul.f32 %v252, %v264
    %v271 = vpack.c.bf16 %v267, %v265
    %v272 = vpack.c.bf16 %v268, %v266
    %v273 = vpack.c.bf16 %v269, %v269
    %v274 = vpack.c.bf16 %v270, %v270
    %v275 = vld [vmem:[#allocation2] sm:$0xff]
    %v276 = vld [vmem:[#allocation2 + $0x8] sm:$0xff]
    %v277 = vld [vmem:[#allocation2 + $0x10] sm:$0xff]
    %v278 = vld [vmem:[#allocation2 + $0x18] sm:$0xff]
    %v279 = vld [vmem:[#allocation2 + $0x20] sm:$0xff]
    %v280 = vld [vmem:[#allocation2 + $0x28] sm:$0xff]
    %v281 = vld [vmem:[#allocation2 + $0x30] sm:$0xff]
    %v282 = vld [vmem:[#allocation2 + $0x38] sm:$0xff]
    %v283 = vld [vmem:[#allocation2 + $0x40] sm:$0xff]
    %v284 = vld [vmem:[#allocation2 + $0x48] sm:$0xff]
    %v285 = vld [vmem:[#allocation2 + $0x50] sm:$0xff]
    %v286 = vld [vmem:[#allocation2 + $0x58] sm:$0xff]
    %v287 = vld [vmem:[#allocation2 + $0x60] sm:$0xff]
    %v288 = vld [vmem:[#allocation2 + $0x68] sm:$0xff]
    %v289 = vld [vmem:[#allocation2 + $0x70] sm:$0xff]
    %v290 = vld [vmem:[#allocation2 + $0x78] sm:$0xff]
    %v291 = vld [vmem:[#allocation2 + $0x80] sm:$0xff]
    %v292 = vld [vmem:[#allocation2 + $0x88] sm:$0xff]
    %v293 = vld [vmem:[#allocation2 + $0x90] sm:$0xff]
    %v294 = vld [vmem:[#allocation2 + $0x98] sm:$0xff]
    %v295 = vld [vmem:[#allocation2 + $0xa0] sm:$0xff]
    %v296 = vld [vmem:[#allocation2 + $0xa8] sm:$0xff]
    %v297 = vld [vmem:[#allocation2 + $0xb0] sm:$0xff]
    %v298 = vld [vmem:[#allocation2 + $0xb8] sm:$0xff]
    %v299 = vld [vmem:[#allocation2 + $0xc0] sm:$0xff]
    %v300 = vld [vmem:[#allocation2 + $0xc8] sm:$0xff]
    %v301 = vld [vmem:[#allocation2 + $0xd0] sm:$0xff]
    %v302 = vld [vmem:[#allocation2 + $0xd8] sm:$0xff]
    %v303 = vld [vmem:[#allocation2 + $0xe0] sm:$0xff]
    %v304 = vld [vmem:[#allocation2 + $0xe8] sm:$0xff]
    %v305 = vld [vmem:[#allocation2 + $0xf0] sm:$0xff]
    %v306 = vld [vmem:[#allocation2 + $0xf8] sm:$0xff]
    %v307 = vperm.slane %v43, 3
    %v308 = vperm.slane %v44, 3
    %v341 = vunpack.c.l.b16 %v275
    %v342 = vunpack.c.h.b16 %v275
    %v343 = vunpack.c.l.b16 %v276
    %v344 = vunpack.c.h.b16 %v276
    %v345 = vunpack.c.l.b16 %v277
    %v346 = vunpack.c.h.b16 %v277
    %v347 = vunpack.c.l.b16 %v278
    %v348 = vunpack.c.h.b16 %v278
    %v349 = vunpack.c.l.b16 %v279
    %v350 = vunpack.c.h.b16 %v279
    %v351 = vunpack.c.l.b16 %v280
    %v352 = vunpack.c.h.b16 %v280
    %v353 = vunpack.c.l.b16 %v281
    %v354 = vunpack.c.h.b16 %v281
    %v355 = vunpack.c.l.b16 %v282
    %v356 = vunpack.c.h.b16 %v282
    %v357 = vunpack.c.l.b16 %v283
    %v358 = vunpack.c.h.b16 %v283
    %v359 = vunpack.c.l.b16 %v284
    %v360 = vunpack.c.h.b16 %v284
    %v361 = vunpack.c.l.b16 %v285
    %v362 = vunpack.c.h.b16 %v285
    %v363 = vunpack.c.l.b16 %v286
    %v364 = vunpack.c.h.b16 %v286
    %v365 = vunpack.c.l.b16 %v287
    %v366 = vunpack.c.h.b16 %v287
    %v367 = vunpack.c.l.b16 %v288
    %v368 = vunpack.c.h.b16 %v288
    %v369 = vunpack.c.l.b16 %v289
    %v370 = vunpack.c.h.b16 %v289
    %v371 = vunpack.c.l.b16 %v290
    %v372 = vunpack.c.h.b16 %v290
    %v373 = vunpack.c.l.b16 %v291
    %v374 = vunpack.c.h.b16 %v291
    %v375 = vunpack.c.l.b16 %v292
    %v376 = vunpack.c.h.b16 %v292
    %v377 = vunpack.c.l.b16 %v293
    %v378 = vunpack.c.h.b16 %v293
    %v379 = vunpack.c.l.b16 %v294
    %v380 = vunpack.c.h.b16 %v294
    %v381 = vunpack.c.l.b16 %v295
    %v382 = vunpack.c.h.b16 %v295
    %v383 = vunpack.c.l.b16 %v296
    %v384 = vunpack.c.h.b16 %v296
    %v385 = vunpack.c.l.b16 %v297
    %v386 = vunpack.c.h.b16 %v297
    %v387 = vunpack.c.l.b16 %v298
    %v388 = vunpack.c.h.b16 %v298
    %v389 = vunpack.c.l.b16 %v299
    %v390 = vunpack.c.h.b16 %v299
    %v391 = vunpack.c.l.b16 %v300
    %v392 = vunpack.c.h.b16 %v300
    %v393 = vunpack.c.l.b16 %v301
    %v394 = vunpack.c.h.b16 %v301
    %v395 = vunpack.c.l.b16 %v302
    %v396 = vunpack.c.h.b16 %v302
    %v397 = vunpack.c.l.b16 %v303
    %v398 = vunpack.c.h.b16 %v303
    %v399 = vunpack.c.l.b16 %v304
    %v400 = vunpack.c.h.b16 %v304
    %v401 = vunpack.c.l.b16 %v305
    %v402 = vunpack.c.h.b16 %v305
    %v403 = vunpack.c.l.b16 %v306
    %v404 = vunpack.c.h.b16 %v306
    %v405 = vpack.c.b16 %v343, %v341
    %v406 = vpack.c.b16 %v344, %v342
    %v407 = vpack.c.b16 %v347, %v345
    %v408 = vpack.c.b16 %v348, %v346
    %v409 = vpack.c.b16 %v351, %v349
    %v410 = vpack.c.b16 %v352, %v350
    %v411 = vpack.c.b16 %v355, %v353
    %v412 = vpack.c.b16 %v356, %v354
    %v413 = vpack.c.b16 %v359, %v357
    %v414 = vpack.c.b16 %v360, %v358
    %v415 = vpack.c.b16 %v363, %v361
    %v416 = vpack.c.b16 %v364, %v362
    %v417 = vpack.c.b16 %v367, %v365
    %v418 = vpack.c.b16 %v368, %v366
    %v419 = vpack.c.b16 %v371, %v369
    %v420 = vpack.c.b16 %v372, %v370
    %v421 = vpack.c.b16 %v375, %v373
    %v422 = vpack.c.b16 %v376, %v374
    %v423 = vpack.c.b16 %v379, %v377
    %v424 = vpack.c.b16 %v380, %v378
    %v425 = vpack.c.b16 %v383, %v381
    %v426 = vpack.c.b16 %v384, %v382
    %v427 = vpack.c.b16 %v387, %v385
    %v428 = vpack.c.b16 %v388, %v386
    %v429 = vpack.c.b16 %v391, %v389
    %v430 = vpack.c.b16 %v392, %v390
    %v431 = vpack.c.b16 %v395, %v393
    %v432 = vpack.c.b16 %v396, %v394
    %v433 = vpack.c.b16 %v399, %v397
    %v434 = vpack.c.b16 %v400, %v398
    %v435 = vpack.c.b16 %v403, %v401
    %v436 = vpack.c.b16 %v404, %v402
    %469 = vmatpush.bf16.msra.mxu0 %v419
    %470 = vmatpush.bf16.msra.mxu0 %v417
    %471 = vmatpush.bf16.msra.mxu0 %v415
    %472 = vmatpush.bf16.msra.mxu0 %v413
    %473 = vmatpush.bf16.msra.mxu0 %v411
    %474 = vmatpush.bf16.msra.mxu0 %v409
    %475 = vmatpush.bf16.msra.mxu0 %v407
    %476 = vmatpush.bf16.msra.mxu0 %v405
    %477 = vmatmul.bf16.gmra.mxu0 %v271
    %v478 = vpop.f32.mrf.mxu0
    %v479 = vadd.f32 %v307, %v478
    %v480 = vpop.f32.mrf.mxu0
    %v481 = vadd.f32 %v307, %v480
    %482 = vmatmul.bf16.gmra.mxu0 %v273
    %v483 = vpop.f32.mrf.mxu0
    %v484 = vadd.f32 %v307, %v483
    %v485 = vpop.f32.mrf.mxu0
    %486 = vdwg.mxu0
    %487 = vmatpush.bf16.msra.mxu0 %v435
    %488 = vmatpush.bf16.msra.mxu0 %v433
    %489 = vmatpush.bf16.msra.mxu0 %v431
    %490 = vmatpush.bf16.msra.mxu0 %v429
    %491 = vmatpush.bf16.msra.mxu0 %v427
    %492 = vmatpush.bf16.msra.mxu0 %v425
    %493 = vmatpush.bf16.msra.mxu0 %v423
    %494 = vmatpush.bf16.msra.mxu0 %v421
    %495 = vmatmul.bf16.gmra.mxu0 %v272
    %v496 = vpop.f32.mrf.mxu0
    %v497 = vadd.f32 %v479, %v496
    %v498 = vpop.f32.mrf.mxu0
    %v499 = vadd.f32 %v481, %v498
    %500 = vmatmul.bf16.gmra.mxu0 %v274
    %v501 = vpop.f32.mrf.mxu0
    %v502 = vadd.f32 %v484, %v501
    %v503 = vpop.f32.mrf.mxu0
    %504 = vdwg.mxu0
    %505 = vmatpush.bf16.msra.mxu0 %v420
    %506 = vmatpush.bf16.msra.mxu0 %v418
    %507 = vmatpush.bf16.msra.mxu0 %v416
    %508 = vmatpush.bf16.msra.mxu0 %v414
    %509 = vmatpush.bf16.msra.mxu0 %v412
    %510 = vmatpush.bf16.msra.mxu0 %v410
    %511 = vmatpush.bf16.msra.mxu0 %v408
    %512 = vmatpush.bf16.msra.mxu0 %v406
    %513 = vmatmul.bf16.gmra.mxu0 %v271
    %v514 = vpop.f32.mrf.mxu0
    %v515 = vadd.f32 %v308, %v514
    %v516 = vpop.f32.mrf.mxu0
    %v517 = vadd.f32 %v308, %v516
    %518 = vmatmul.bf16.gmra.mxu0 %v273
    %v519 = vpop.f32.mrf.mxu0
    %v520 = vadd.f32 %v308, %v519
    %v521 = vpop.f32.mrf.mxu0
    %522 = vdwg.mxu0
    %523 = vmatpush.bf16.msra.mxu0 %v436
    %524 = vmatpush.bf16.msra.mxu0 %v434
    %525 = vmatpush.bf16.msra.mxu0 %v432
    %526 = vmatpush.bf16.msra.mxu0 %v430
    %527 = vmatpush.bf16.msra.mxu0 %v428
    %528 = vmatpush.bf16.msra.mxu0 %v426
    %529 = vmatpush.bf16.msra.mxu0 %v424
    %530 = vmatpush.bf16.msra.mxu0 %v422
    %531 = vmatmul.bf16.gmra.mxu0 %v272
    %v532 = vpop.f32.mrf.mxu0
    %v533 = vadd.f32 %v515, %v532
    %v534 = vpop.f32.mrf.mxu0
    %v535 = vadd.f32 %v517, %v534
    %536 = vmatmul.bf16.gmra.mxu0 %v274
    %v537 = vpop.f32.mrf.mxu0
    %v538 = vadd.f32 %v520, %v537
    %v539 = vpop.f32.mrf.mxu0
    %540 = vdwg.mxu0
    %v541 = vadd.f32 %v497, %v533
    %542 = vadd.xlane.f32.xlu0 %v541
    %v543 = vpop.xlane.xlu0 %542
    %v544 = vadd.f32 %v499, %v535
    %545 = vadd.xlane.f32.xlu0 %v544
    %v546 = vpop.xlane.xlu0 %545
    %v547 = vadd.f32 %v502, %v538
    %548 = vadd.xlane.f32.xlu0 %v547
    %v549 = vpop.xlane.xlu0 %548
    %v550 = vmul.f32 %v543, %v125
    %v551 = vmul.f32 %v546, %v125
    %v552 = vmul.f32 %v549, %v125
    %v553 = vmul.f32 %v497, %v497
    %v554 = vmul.f32 %v533, %v533
    %v555 = vmul.f32 %v499, %v499
    %v556 = vmul.f32 %v535, %v535
    %v557 = vmul.f32 %v502, %v502
    %v558 = vmul.f32 %v538, %v538
    %v559 = vadd.f32 %v553, %v554
    %560 = vadd.xlane.f32.xlu0 %v559
    %v561 = vpop.xlane.xlu0 %560
    %v562 = vadd.f32 %v555, %v556
    %563 = vadd.xlane.f32.xlu0 %v562
    %v564 = vpop.xlane.xlu0 %563
    %v565 = vadd.f32 %v557, %v558
    %566 = vadd.xlane.f32.xlu0 %v565
    %v567 = vpop.xlane.xlu0 %566
    %v568 = vmul.f32 %v561, %v125
    %v569 = vmul.f32 %v564, %v125
    %v570 = vmul.f32 %v567, %v125
    %v571 = vmul.f32 %v550, %v550
    %v572 = vmul.f32 %v551, %v551
    %v573 = vmul.f32 %v552, %v552
    %v574 = vsub.f32 %v568, %v571
    %v575 = vsub.f32 %v569, %v572
    %v576 = vsub.f32 %v570, %v573
    %v577 = vmax.f32 %v574, 0.0
    %v578 = vmax.f32 %v575, 0.0
    %v579 = vmax.f32 %v576, 0.0
    %v580 = vadd.f32 %v577, 1e-05
    %v581 = vadd.f32 %v578, 1e-05
    %v582 = vadd.f32 %v579, 1e-05
    %v583 = vrsqrt.pop %v580
    %v584 = vmul.f32 %v583, %v580
    %v585 = vmul.f32 %v584, %v583
    %v586 = vmul.f32 0.5, %v585
    %v587 = vsub.f32 1.5, %v586
    %v588 = vmul.f32 %v583, %v587
    %vm589 = vweird.f32 %v580
    %vm590 = vweird.f32 %v583
    %vm591 = vmor %vm589, %vm590
    %v592 = vsel %vm591, %v583, %v588
    %v593 = vrsqrt.pop %v581
    %v594 = vmul.f32 %v593, %v581
    %v595 = vmul.f32 %v594, %v593
    %v596 = vmul.f32 0.5, %v595
    %v597 = vsub.f32 1.5, %v596
    %v598 = vmul.f32 %v593, %v597
    %vm599 = vweird.f32 %v581
    %vm600 = vweird.f32 %v593
    %vm601 = vmor %vm599, %vm600
    %v602 = vsel %vm601, %v593, %v598
    %v603 = vrsqrt.pop %v582
    %v604 = vmul.f32 %v603, %v582
    %v605 = vmul.f32 %v604, %v603
    %v606 = vmul.f32 0.5, %v605
    %v607 = vsub.f32 1.5, %v606
    %v608 = vmul.f32 %v603, %v607
    %vm609 = vweird.f32 %v582
    %vm610 = vweird.f32 %v603
    %vm611 = vmor %vm609, %vm610
    %v612 = vsel %vm611, %v603, %v608
    %v613 = vsub.f32 %v497, %v550
    %v614 = vsub.f32 %v533, %v550
    %v615 = vsub.f32 %v499, %v551
    %v616 = vsub.f32 %v535, %v551
    %v617 = vsub.f32 %v502, %v552
    %v618 = vsub.f32 %v538, %v552
    %v619 = vmul.f32 %v613, %v592
    %v620 = vmul.f32 %v614, %v592
    %v621 = vmul.f32 %v615, %v602
    %v622 = vmul.f32 %v616, %v602
    %v623 = vmul.f32 %v617, %v612
    %v624 = vmul.f32 %v618, %v612
    %v625 = vperm.slane %v43, 4
    %v626 = vperm.slane %v44, 4
    %v627 = vmul.f32 %v619, %v625
    %v628 = vmul.f32 %v620, %v626
    %v629 = vmul.f32 %v621, %v625
    %v630 = vmul.f32 %v622, %v626
    %v631 = vmul.f32 %v623, %v625
    %v632 = vmul.f32 %v624, %v626
    %v633 = vperm.slane %v43, 5
    %v634 = vperm.slane %v44, 5
    %v635 = vadd.f32 %v627, %v633
    %v636 = vadd.f32 %v628, %v634
    %v637 = vadd.f32 %v629, %v633
    %v638 = vadd.f32 %v630, %v634
    %v639 = vadd.f32 %v631, %v633
    %v640 = vadd.f32 %v632, %v634
    %v641 = vmul.f32 %v635, %v635
    %v642 = vmul.f32 %v636, %v636
    %v643 = vmul.f32 %v637, %v637
    %v644 = vmul.f32 %v638, %v638
    %v645 = vmul.f32 %v639, %v639
    %v646 = vmul.f32 %v640, %v640
    %v647 = vmul.f32 %v635, 0.7978846
    %v648 = vmul.f32 %v636, 0.7978846
    %v649 = vmul.f32 %v637, 0.7978846
    %v650 = vmul.f32 %v638, 0.7978846
    %v651 = vmul.f32 %v639, 0.7978846
    %v652 = vmul.f32 %v640, 0.7978846
    %v653 = vmul.f32 %v641, 0.044715
    %v654 = vmul.f32 %v642, 0.044715
    %v655 = vmul.f32 %v643, 0.044715
    %v656 = vmul.f32 %v644, 0.044715
    %v657 = vmul.f32 %v645, 0.044715
    %v658 = vmul.f32 %v646, 0.044715
    %v659 = vadd.f32 %v653, 1.0
    %v660 = vadd.f32 %v654, 1.0
    %v661 = vadd.f32 %v655, 1.0
    %v662 = vadd.f32 %v656, 1.0
    %v663 = vadd.f32 %v657, 1.0
    %v664 = vadd.f32 %v658, 1.0
    %v665 = vmul.f32 %v647, %v659
    %v666 = vmul.f32 %v648, %v660
    %v667 = vmul.f32 %v649, %v661
    %v668 = vmul.f32 %v650, %v662
    %v669 = vmul.f32 %v651, %v663
    %v670 = vmul.f32 %v652, %v664
    %v671 = vmul.f32 %v635, 0.5
    %v672 = vmul.f32 %v636, 0.5
    %v673 = vmul.f32 %v637, 0.5
    %v674 = vmul.f32 %v638, 0.5
    %v675 = vmul.f32 %v639, 0.5
    %v676 = vmul.f32 %v640, 0.5
    %v677 = vtanh.pop %v665
    %v678 = vtanh.pop %v666
    %v679 = vtanh.pop %v667
    %v680 = vtanh.pop %v668
    %v681 = vtanh.pop %v669
    %v682 = vtanh.pop %v670
    %v683 = vadd.f32 %v677, 1.0
    %v684 = vadd.f32 %v678, 1.0
    %v685 = vadd.f32 %v679, 1.0
    %v686 = vadd.f32 %v680, 1.0
    %v687 = vadd.f32 %v681, 1.0
    %v688 = vadd.f32 %v682, 1.0
    %v689 = vmul.f32 %v671, %v683
    %v690 = vmul.f32 %v672, %v684
    %v691 = vmul.f32 %v673, %v685
    %v692 = vmul.f32 %v674, %v686
    %v693 = vmul.f32 %v675, %v687
    %v694 = vmul.f32 %v676, %v688
    %v695 = vld [vmem:[%s3] sm:$0xff]
    %v696 = vpack.c.bf16 %v691, %v689
    %v697 = vpack.c.bf16 %v692, %v690
    %v698 = vpack.c.bf16 %v693, %v693
    %v699 = vpack.c.bf16 %v694, %v694
    %v700 = vld [vmem:[%s5] sm:$0xff]
    %702 = vset.pattern.permute.xlu0 0
    %703 = vperm.xlu0 %702, %v700
    %v704 = vpop.permute.xlu0 %703
    %v707 = vunpack.c.l.b16 %v695
    %v708 = vunpack.c.h.b16 %v695
    %v709 = vpack.c.b16 %v707, %v707
    %v710 = vpack.c.b16 %v708, %v708
    %713 = vmatpush.bf16.xpose.msra.mxu0 0
    %714 = vmatpush.bf16.xpose.msra.mxu0 0
    %715 = vmatpush.bf16.xpose.msra.mxu0 0
    %716 = vmatpush.bf16.xpose.msra.mxu0 0
    %717 = vmatpush.bf16.xpose.msra.mxu0 0
    %718 = vmatpush.bf16.xpose.msra.mxu0 0
    %719 = vmatpush.bf16.xpose.msra.mxu0 %v698
    %720 = vmatpush.bf16.xpose.msra.mxu0 %v696
    %721 = vmatmul.bf16.gmra.mxu0 %v709
    %v722 = vpop.f32.mrf.mxu0
    %v723 = vadd.f32 %v704, %v722
    %v724 = vpop.f32.mrf.mxu0
    %725 = vdwg.mxu0
    %726 = vmatpush.bf16.xpose.msra.mxu0 0
    %727 = vmatpush.bf16.xpose.msra.mxu0 0
    %728 = vmatpush.bf16.xpose.msra.mxu0 0
    %729 = vmatpush.bf16.xpose.msra.mxu0 0
    %730 = vmatpush.bf16.xpose.msra.mxu0 0
    %731 = vmatpush.bf16.xpose.msra.mxu0 0
    %732 = vmatpush.bf16.xpose.msra.mxu0 %v699
    %733 = vmatpush.bf16.xpose.msra.mxu0 %v697
    %734 = vmatmul.bf16.gmra.mxu0 %v710
    %v735 = vpop.f32.mrf.mxu0
    %v736 = vadd.f32 %v723, %v735
    %v737 = vpop.f32.mrf.mxu0
    %738 = vdwg.mxu0
    %vm739 = vcmask 195584
    %740 = vst.msk [vmem:[%s6] sm:$0xff] %vm739, %v736
    // Predicated region
    $region30: #{mlp_forward.1} parent=1 // pred_check
      _
    $region31: #{mlp_forward.1} parent=1 // pred_check_branch
      %742 = sbr.rel (0) target = $region33
    $region32: #{mlp_forward.1} parent=1 // pred_region
      _
    $region33: #{mlp_forward.1} parent=1 // pred_fallthru
      _
    // Predicated region
    $region34: #{mlp_forward.1} parent=1 // pred_check
      _
    $region35: #{mlp_forward.1} parent=1 // pred_check_branch
      %744 = sbr.rel (0) target = $region37
    $region36: #{mlp_forward.1} parent=1 // pred_region
      _
    $region37: #{mlp_forward.1} parent=1 // pred_fallthru
      _
    %745 = vsyncpa [#allocation3], 1

</llo_original>
